<compile_context>
chip_gen: v6e
topology: v6e:2x2x1
jax: 0.10.0
libtpu: 0.0.40
codegen_flags: <defaults>
</compile_context>

<pallas_src>
from functools import partial

import jax
import jax.numpy as jnp
from jax import lax
from jax.experimental import pallas as pl
from jax.experimental.pallas import tpu as pltpu

# ------------------------------ synthetic config ------------------------------
HIDDEN = 32
LN_EPS = 1e-12
BATCH = 2
SEQ = 8

LANE = 128
SUBLANE = 8
TM_TARGET = 256                      # default row tile (multiple of 8)
VMEM_BUDGET = 48 * 1024 * 1024       # stay well under v7x's 64 MiB physical VMEM


def _round_up(x, m):
    return ((x + m - 1) // m) * m


# -------------------------------- Pallas kernel --------------------------------
def bert_self_output_kernel(x_ref, res_ref, w_ref, p_ref, out_ref, *, inv_h, eps):
    """One row tile: LayerNorm(x @ W + bias + residual).

    All operands are zero-padded to 128-lane multiples on the feature axes, so
    padded lanes of y are exactly zero and the unmasked sums below equal the
    sums over the real H columns (no iota / where masking needed).
    """
    p = p_ref[...]                                    # (3, Hp): [bias; gamma; beta]
    bias, gamma, beta = p[0:1, :], p[1:2, :], p[2:3, :]

    # dense (MXU, f32 accumulate) + dropout(identity) + residual (f32).
    # TODO(synk): nn.Dropout is identity in eval mode; training-mode RNG
    # dropout is not implemented.
    y = jnp.dot(x_ref[...], w_ref[...], preferred_element_type=jnp.float32)
    y = y + bias + res_ref[...]

    # LayerNorm over the real H columns (padded lanes contribute 0 to both sums).
    mean = jnp.sum(y, axis=-1, keepdims=True) * inv_h
    var = jnp.sum(y * y, axis=-1, keepdims=True) * inv_h - mean * mean
    # gamma/beta are zero in padded lanes -> padded output lanes stay 0.
    out_ref[...] = (y - mean) * lax.rsqrt(var + eps) * gamma + beta


# ----------------------------------- wrappers -----------------------------------
def prepare_params(weight, bias, gamma, beta, mxu_dtype=jnp.float32):
    """Pad/pack the constant parameters ONCE at init (not per forward).

    `weight` is stored (in_features, out_features), i.e. torch W.T, so the
    kernel computes y = x @ W + b (same math as nn.Linear). Zero-padding the
    output columns of W (and bias/gamma/beta) keeps padded lanes of y at 0.
    """
    K, H = weight.shape
    Kp, Hp = _round_up(K, LANE), _round_up(H, LANE)
    w = weight.astype(mxu_dtype)
    if (Kp, Hp) != (K, H):
        w = jnp.zeros((Kp, Hp), mxu_dtype).at[:K, :H].set(w)
    params = (jnp.zeros((3, Hp), jnp.float32)
              .at[0, :H].set(bias.astype(jnp.float32))
              .at[1, :H].set(gamma.astype(jnp.float32))
              .at[2, :H].set(beta.astype(jnp.float32)))
    return w, params


def bert_self_output_pallas(hidden_states, input_tensor, w_p, params,
                            eps=LN_EPS, tm_target=TM_TARGET):
    B, S, H = hidden_states.shape
    M = B * S
    Kp, Hp = w_p.shape
    mxu_dtype = w_p.dtype
    itemsize = jnp.dtype(mxu_dtype).itemsize

    # Fixed moderate row tile; shrink only if one tile would exceed the VMEM
    # budget (x/res/out double-buffered + resident weight + packed params).
    TM = min(tm_target, _round_up(M, SUBLANE))

    def block_bytes(tm):
        return (2 * tm * Kp * itemsize          # x (double-buffered)
                + 2 * tm * Hp * 4               # residual (double-buffered, f32)
                + 2 * tm * Hp * 4               # output (double-buffered, f32)
                + 2 * Kp * Hp * itemsize        # weight (resident)
                + 2 * 3 * Hp * 4)               # packed bias/gamma/beta

    while TM > SUBLANE and block_bytes(TM) > VMEM_BUDGET:
        TM = max(SUBLANE, _round_up(TM // 2, SUBLANE))
    Mp = _round_up(M, TM)
    vmem_limit = int(min(max(1.5 * block_bytes(TM), 4 * 1024 * 1024),
                         64 * 1024 * 1024))

    x2 = hidden_states.reshape(M, H)
    r2 = input_tensor.reshape(M, H)
    # Per-call padding only when shapes are not already aligned (for real BERT
    # H % 128 == 0 and M % 8 == 0, so these branches are no-ops there).
    if Mp > M or Kp > H:
        x_p = jnp.zeros((Mp, Kp), mxu_dtype).at[:M, :H].set(x2.astype(mxu_dtype))
    else:
        x_p = x2.astype(mxu_dtype)
    if Mp > M or Hp > H:
        res_p = jnp.zeros((Mp, Hp), jnp.float32).at[:M, :H].set(
            r2.astype(jnp.float32))
    else:
        res_p = r2.astype(jnp.float32)

    kernel = partial(bert_self_output_kernel, inv_h=1.0 / H, eps=eps)

    # NOTE: for much larger H (or when fusing more of the layer), add a K
    # reduction grid axis ("arbitrary", last) with a (TM, TN) f32 VMEM
    # accumulator and tile N, so the weight no longer has to be fully resident.
    out = pl.pallas_call(
        kernel,
        out_shape=jax.ShapeDtypeStruct((Mp, Hp), jnp.float32),
        grid=(Mp // TM,),
        in_specs=[
            pl.BlockSpec((TM, Kp), lambda i: (i, 0)),   # hidden_states rows
            pl.BlockSpec((TM, Hp), lambda i: (i, 0)),   # residual rows
            pl.BlockSpec((Kp, Hp), lambda i: (0, 0)),   # weight (resident)
            pl.BlockSpec((3, Hp), lambda i: (0, 0)),    # packed bias/gamma/beta
        ],
        out_specs=pl.BlockSpec((TM, Hp), lambda i: (i, 0)),
        compiler_params=pltpu.CompilerParams(
            dimension_semantics=("parallel",),
            vmem_limit_bytes=vmem_limit,
        ),
    )(x_p, res_p, w_p, params)

    if Mp > M or Hp > H:
        out = out[:M, :H]
    return out.reshape(B, S, H)


# ------------------------- pure-JAX reference (checking) ------------------------
def bert_self_output_ref(hidden_states, input_tensor, weight, bias,
                         gamma, beta, eps=LN_EPS):
    y = hidden_states @ weight + bias + input_tensor
    mean = jnp.mean(y, axis=-1, keepdims=True)
    var = jnp.mean((y - mean) ** 2, axis=-1, keepdims=True)
    return (y - mean) / jnp.sqrt(var + eps) * gamma + beta


# ------------------------------------ main --------------------------------------
if __name__ == "__main__":
    root = jax.random.PRNGKey(0)
    kx, kr, kw, kb, kg, kbe = jax.random.split(root, 6)

    hidden_states = jax.random.normal(kx, (BATCH, SEQ, HIDDEN), jnp.float32)
    input_tensor = jax.random.normal(kr, (BATCH, SEQ, HIDDEN), jnp.float32)

    weight = jax.random.normal(kw, (HIDDEN, HIDDEN), jnp.float32) * 0.02
    bias = jax.random.normal(kb, (HIDDEN,), jnp.float32) * 0.02
    gamma = 1.0 + jax.random.normal(kg, (HIDDEN,), jnp.float32) * 0.02
    beta = jax.random.normal(kbe, (HIDDEN,), jnp.float32) * 0.02

    ref = bert_self_output_ref(hidden_states, input_tensor,
                               weight, bias, gamma, beta)

    fwd = jax.jit(bert_self_output_pallas)

    # f32 MXU operands: matches the f32 reference to 1e-4 at this toy size.
    w_f32, p_f32 = prepare_params(weight, bias, gamma, beta, jnp.float32)
    out = jax.block_until_ready(fwd(hidden_states, input_tensor, w_f32, p_f32))
    assert out.shape == (BATCH, SEQ, HIDDEN)
    err = jnp.max(jnp.abs(out - ref))
    assert jnp.allclose(out, ref, atol=1e-4, rtol=1e-4), f"f32 max abs err {err}"

    # bf16 MXU operands (production path on v5e/v6e/v7x): f32 accumulate, f32
    # residual add and f32 LayerNorm stats, so only the matmul inputs are rounded.
    w_bf16, p_bf16 = prepare_params(weight, bias, gamma, beta, jnp.bfloat16)
    out_b = jax.block_until_ready(fwd(hidden_states, input_tensor, w_bf16, p_bf16))
    err_b = jnp.max(jnp.abs(out_b - ref))
    assert jnp.allclose(out_b, ref, atol=1e-2, rtol=1e-2), \
        f"bf16 max abs err {err_b}"

    print("KERNEL_OK")
</pallas_src>

<mosaic_0001>
module attributes {stable_mosaic.version = 11 : i64} {
  func.func @bert_self_output_kernel(%arg0: i32, %arg1: memref<16x128xf32, #tpu.memory_space<vmem>>, %arg2: memref<16x128xf32, #tpu.memory_space<vmem>>, %arg3: memref<128x128xf32, #tpu.memory_space<vmem>>, %arg4: memref<3x128xf32, #tpu.memory_space<vmem>>, %arg5: memref<16x128xf32, #tpu.memory_space<vmem>>) attributes {dimension_semantics = [#tpu.dimension_semantics<parallel>], iteration_bounds = array<i64: 1>, scalar_prefetch = 0 : i64, scratch_operands = 0 : i64, tpu.core_type = #tpu.core_type<tc>, window_params = [{transform_indices = @transform_0, window_bounds = array<i64: 16, 128>}, {transform_indices = @transform_1, window_bounds = array<i64: 16, 128>}, {pipeline_mode = #tpu.pipeline_mode<synchronous>, transform_indices = @transform_2, window_bounds = array<i64: 128, 128>}, {pipeline_mode = #tpu.pipeline_mode<synchronous>, transform_indices = @transform_3, window_bounds = array<i64: 3, 128>}, {transform_indices = @transform_4, window_bounds = array<i64: 16, 128>}]} {
    %c0 = arith.constant 0 : index
    %c0_0 = arith.constant 0 : index
    %0 = vector.load %arg4[%c0, %c0_0] : memref<3x128xf32, #tpu.memory_space<vmem>>, vector<3x128xf32>
    %1 = vector.extract_strided_slice %0 {offsets = [0, 0], sizes = [1, 128], strides = [1, 1]} : vector<3x128xf32> to vector<1x128xf32>
    %2 = vector.extract_strided_slice %0 {offsets = [1, 0], sizes = [1, 128], strides = [1, 1]} : vector<3x128xf32> to vector<1x128xf32>
    %3 = vector.extract_strided_slice %0 {offsets = [2, 0], sizes = [1, 128], strides = [1, 1]} : vector<3x128xf32> to vector<1x128xf32>
    %c0_1 = arith.constant 0 : index
    %c0_2 = arith.constant 0 : index
    %4 = vector.load %arg1[%c0_1, %c0_2] : memref<16x128xf32, #tpu.memory_space<vmem>>, vector<16x128xf32>
    %c0_3 = arith.constant 0 : index
    %c0_4 = arith.constant 0 : index
    %5 = vector.load %arg3[%c0_3, %c0_4] : memref<128x128xf32, #tpu.memory_space<vmem>>, vector<128x128xf32>
    %cst = arith.constant dense<0.000000e+00> : vector<16x128xf32>
    %6 = tpu.matmul %4, %5, %cst {dimension_numbers = #tpu.dot_dimension_numbers<[1], [0], [0], [1], [0, 0, 1, 1], [], []>} : vector<16x128xf32>, vector<128x128xf32>, vector<16x128xf32> -> vector<16x128xf32>
    %7 = vector.broadcast %1 : vector<1x128xf32> to vector<16x128xf32>
    %8 = arith.addf %6, %7 : vector<16x128xf32>
    %c0_5 = arith.constant 0 : index
    %c0_6 = arith.constant 0 : index
    %9 = vector.load %arg2[%c0_5, %c0_6] : memref<16x128xf32, #tpu.memory_space<vmem>>, vector<16x128xf32>
    %10 = arith.addf %8, %9 : vector<16x128xf32>
    %cst_7 = arith.constant dense<0.000000e+00> : vector<16xf32>
    %11 = vector.multi_reduction <add>, %10, %cst_7 [1] : vector<16x128xf32> to vector<16xf32>
    %12 = vector.shape_cast %11 : vector<16xf32> to vector<16x1xf32>
    %cst_8 = arith.constant 3.125000e-02 : f32
    %13 = vector.broadcast %cst_8 : f32 to vector<16x1xf32>
    %14 = arith.mulf %12, %13 : vector<16x1xf32>
    %15 = arith.mulf %10, %10 : vector<16x128xf32>
    %cst_9 = arith.constant dense<0.000000e+00> : vector<16xf32>
    %16 = vector.multi_reduction <add>, %15, %cst_9 [1] : vector<16x128xf32> to vector<16xf32>
    %17 = vector.shape_cast %16 : vector<16xf32> to vector<16x1xf32>
    %cst_10 = arith.constant 3.125000e-02 : f32
    %18 = vector.broadcast %cst_10 : f32 to vector<16x1xf32>
    %19 = arith.mulf %17, %18 : vector<16x1xf32>
    %20 = arith.mulf %14, %14 : vector<16x1xf32>
    %21 = arith.subf %19, %20 : vector<16x1xf32>
    %22 = vector.broadcast %14 : vector<16x1xf32> to vector<16x128xf32>
    %23 = arith.subf %10, %22 : vector<16x128xf32>
    %cst_11 = arith.constant 9.99999996E-13 : f32
    %24 = vector.broadcast %cst_11 : f32 to vector<16x1xf32>
    %25 = arith.addf %21, %24 : vector<16x1xf32>
    %26 = math.rsqrt %25 : vector<16x1xf32>
    %27 = vector.broadcast %26 : vector<16x1xf32> to vector<16x128xf32>
    %28 = arith.mulf %23, %27 : vector<16x128xf32>
    %29 = vector.broadcast %2 : vector<1x128xf32> to vector<16x128xf32>
    %30 = arith.mulf %28, %29 : vector<16x128xf32>
    %31 = vector.broadcast %3 : vector<1x128xf32> to vector<16x128xf32>
    %32 = arith.addf %30, %31 : vector<16x128xf32>
    %c0_12 = arith.constant 0 : index
    %c0_13 = arith.constant 0 : index
    %33 = vector.load %arg5[%c0_12, %c0_13] : memref<16x128xf32, #tpu.memory_space<vmem>>, vector<16x128xf32>
    tpu.vector_store %arg5[%c0_12, %c0_13], %32 {strides = array<i32>} : memref<16x128xf32, #tpu.memory_space<vmem>>, vector<16x128xf32>,
    return
  }
  func.func @transform_0(%arg0: i32) -> (i32, i32) {
    %c0_i32 = arith.constant 0 : i32
    %c0_i32_0 = arith.constant 0 : i32
    return %arg0, %c0_i32 : i32, i32
  }
  func.func @transform_1(%arg0: i32) -> (i32, i32) {
    %c0_i32 = arith.constant 0 : i32
    %c0_i32_0 = arith.constant 0 : i32
    return %arg0, %c0_i32 : i32, i32
  }
  func.func @transform_2(%arg0: i32) -> (i32, i32) {
    %c0_i32 = arith.constant 0 : i32
    %c0_i32_0 = arith.constant 0 : i32
    %c0_i32_1 = arith.constant 0 : i32
    return %c0_i32, %c0_i32_0 : i32, i32
  }
  func.func @transform_3(%arg0: i32) -> (i32, i32) {
    %c0_i32 = arith.constant 0 : i32
    %c0_i32_0 = arith.constant 0 : i32
    %c0_i32_1 = arith.constant 0 : i32
    return %c0_i32, %c0_i32_0 : i32, i32
  }
  func.func @transform_4(%arg0: i32) -> (i32, i32) {
    %c0_i32 = arith.constant 0 : i32
    %c0_i32_0 = arith.constant 0 : i32
    return %arg0, %c0_i32 : i32, i32
  }
}

</mosaic_0001>

<llo_original>
// kernel: bert_self_output_pallas.1
$region0: #{bert_self_output_pallas.1}
  #allocation0 [shape = 'u32[]', space=smem, size = 0x4, offset = 0x4, fixed_abs, tag = 'smem constant byte address 0x4 - core index']
  #allocation1 [shape = 'u32[144,128]{1,0:T(1,128)}', space=vmem, size = 0x12000, scoped, tag = 'internal scratch']
  %s0 = inlined_call_operand.vmem [shape: f32[16,128], index: 0, kind: input, shape index: {}]
  %s1 = inlined_call_operand.vmem [shape: f32[16,128], index: 1, kind: input, shape index: {}]
  %s2 = inlined_call_operand.vmem [shape: f32[128,128], index: 2, kind: input, shape index: {}]
  %s3 = inlined_call_operand.vmem [shape: f32[3,128], index: 3, kind: input, shape index: {}]
  %s4 = inlined_call_operand.vmem [shape: f32[16,128], index: 4, kind: output, shape index: {}]
  %s5 = sld [smem:[#allocation0]]
  $region26: #{bert_self_output_pallas.1} parent=0
    _
  %s7 = ssub.s32 1, %s5
  %s8 = scalar_select 0, %s7, %s5
  // Predicated region
  $region2: #{bert_self_output_pallas.1} parent=0 // pred_check
    _
  $region3: #{bert_self_output_pallas.1} parent=0 // pred_check_branch
    %10 = sbr.rel (0) target = $region5
  $region4: #{bert_self_output_pallas.1} parent=0 // pred_region
    _
  $region5: #{bert_self_output_pallas.1} parent=0 // pred_fallthru
    _
  // Predicated region
  $region6: #{bert_self_output_pallas.1} parent=0 // pred_check
    _
  $region7: #{bert_self_output_pallas.1} parent=0 // pred_check_branch
    %12 = sbr.rel (0) target = $region9
  $region8: #{bert_self_output_pallas.1} parent=0 // pred_region
    _
  $region9: #{bert_self_output_pallas.1} parent=0 // pred_fallthru
    _
  // Predicated region
  $region10: #{bert_self_output_pallas.1} parent=0 // pred_check
    _
  $region11: #{bert_self_output_pallas.1} parent=0 // pred_check_branch
    %14 = sbr.rel (0) target = $region13
  $region12: #{bert_self_output_pallas.1} parent=0 // pred_region
    _
  $region13: #{bert_self_output_pallas.1} parent=0 // pred_fallthru
    _
  // Predicated region
  $region14: #{bert_self_output_pallas.1} parent=0 // pred_check
    _
  $region15: #{bert_self_output_pallas.1} parent=0 // pred_check_branch
    %16 = sbr.rel (0) target = $region17
  $region16: #{bert_self_output_pallas.1} parent=0 // pred_region
    _
  $region17: #{bert_self_output_pallas.1} parent=0 // pred_fallthru
    _
  %v17 = vld [vmem:[%s3] sm:$0x7]
  %v18 = vld [vmem:[%s0] sm:$0xff]
  %v19 = vld [vmem:[%s0 + $0x8] sm:$0xff]
  %v20 = vld [vmem:[%s2] sm:$0xff]
  %v21 = vld [vmem:[%s2 + $0x8] sm:$0xff]
  %v22 = vld [vmem:[%s2 + $0x10] sm:$0xff]
  %v23 = vld [vmem:[%s2 + $0x18] sm:$0xff]
  %v24 = vld [vmem:[%s2 + $0x20] sm:$0xff]
  %v25 = vld [vmem:[%s2 + $0x28] sm:$0xff]
  %v26 = vld [vmem:[%s2 + $0x30] sm:$0xff]
  %v27 = vld [vmem:[%s2 + $0x38] sm:$0xff]
  %v28 = vld [vmem:[%s2 + $0x40] sm:$0xff]
  %v29 = vld [vmem:[%s2 + $0x48] sm:$0xff]
  %v30 = vld [vmem:[%s2 + $0x50] sm:$0xff]
  %v31 = vld [vmem:[%s2 + $0x58] sm:$0xff]
  %v32 = vld [vmem:[%s2 + $0x60] sm:$0xff]
  %v33 = vld [vmem:[%s2 + $0x68] sm:$0xff]
  %v34 = vld [vmem:[%s2 + $0x70] sm:$0xff]
  %v35 = vld [vmem:[%s2 + $0x78] sm:$0xff]
  %v36 = vlaneseq
  %v37 = vshrl.u32 %v36, 7
  %v38 = vsub.s32 0, %v37
  %v39 = vrot.slane %v17, %v38
  %40 = vmatprep.subr.mxu0 0.0
  %41 = vmatpush1.msra.mxu0 %v35
  %42 = vmatprep.subr.mxu0 0.0
  %43 = vmatpush1.msra.mxu0 %v34
  %44 = vmatprep.subr.mxu0 0.0
  %45 = vmatpush1.msra.mxu0 %v33
  %46 = vmatprep.subr.mxu0 0.0
  %47 = vmatpush1.msra.mxu0 %v32
  %48 = vmatprep.subr.mxu0 0.0
  %49 = vmatpush1.msra.mxu0 %v31
  %50 = vmatprep.subr.mxu0 0.0
  %51 = vmatpush1.msra.mxu0 %v30
  %52 = vmatprep.subr.mxu0 0.0
  %53 = vmatpush1.msra.mxu0 %v29
  %54 = vmatprep.subr.mxu0 0.0
  %55 = vmatpush1.msra.mxu0 %v28
  %56 = vmatprep.subr.mxu0 0.0
  %57 = vmatpush1.msra.mxu0 %v27
  %58 = vmatprep.subr.mxu0 0.0
  %59 = vmatpush1.msra.mxu0 %v26
  %60 = vmatprep.subr.mxu0 0.0
  %61 = vmatpush1.msra.mxu0 %v25
  %62 = vmatprep.subr.mxu0 0.0
  %63 = vmatpush1.msra.mxu0 %v24
  %64 = vmatprep.subr.mxu0 0.0
  %65 = vmatpush1.msra.mxu0 %v23
  %66 = vmatprep.subr.mxu0 0.0
  %67 = vmatpush1.msra.mxu0 %v22
  %68 = vmatprep.subr.mxu0 0.0
  %69 = vmatpush1.msra.mxu0 %v21
  %70 = vmatprep.subr.mxu0 0.0
  %71 = vmatpush1.msra.mxu0 %v20
  %72 = vmatprep.subr.mxu0 0.0
  %73 = vmatpush2.msra.mxu0 0.0
  %74 = vmatprep.subr.mxu0 0.0
  %75 = vmatpush2.msra.mxu0 0.0
  %76 = vmatprep.subr.mxu0 0.0
  %77 = vmatpush2.msra.mxu0 0.0
  %78 = vmatprep.subr.mxu0 0.0
  %79 = vmatpush2.msra.mxu0 0.0
  %80 = vmatprep.subr.mxu0 0.0
  %81 = vmatpush2.msra.mxu0 0.0
  %82 = vmatprep.subr.mxu0 0.0
  %83 = vmatpush2.msra.mxu0 0.0
  %84 = vmatprep.subr.mxu0 0.0
  %85 = vmatpush2.msra.mxu0 0.0
  %86 = vmatprep.subr.mxu0 0.0
  %87 = vmatpush2.msra.mxu0 0.0
  %88 = vmatprep.subr.mxu0 0.0
  %89 = vmatpush2.msra.mxu0 0.0
  %90 = vmatprep.subr.mxu0 0.0
  %91 = vmatpush2.msra.mxu0 0.0
  %92 = vmatprep.subr.mxu0 0.0
  %93 = vmatpush2.msra.mxu0 0.0
  %94 = vmatprep.subr.mxu0 0.0
  %95 = vmatpush2.msra.mxu0 0.0
  %96 = vmatprep.subr.mxu0 0.0
  %97 = vmatpush2.msra.mxu0 0.0
  %98 = vmatprep.subr.mxu0 0.0
  %99 = vmatpush2.msra.mxu0 0.0
  %100 = vmatprep.subr.mxu0 0.0
  %101 = vmatpush2.msra.mxu0 0.0
  %102 = vmatprep.subr.mxu0 0.0
  %103 = vmatpush2.msra.mxu0 0.0
  %104 = vmatprep.mubr.f32.mxu0 0.0
  %105 = vmatmul.mubr.f32.gmra.mxu0 %v18
  %v106 = vpop.f32.mrf.mxu0
  %v107 = vadd.f32 %v39, %v106
  %v108 = vpop.f32.mrf.mxu0
  %109 = vmatprep.mubr.f32.mxu0 0.0
  %110 = vmatmul.mubr.f32.gmra.mxu0 %v19
  %v111 = vpop.f32.mrf.mxu0
  %v112 = vadd.f32 %v39, %v111
  %v113 = vpop.f32.mrf.mxu0
  %114 = vdwg.mxu0
  %v115 = vld [vmem:[%s1] sm:$0xff]
  %v116 = vld [vmem:[%s1 + $0x8] sm:$0xff]
  %v117 = vadd.f32 %v107, %v115
  %v118 = vadd.f32 %v112, %v116
  %119 = vadd.xlane.f32.xlu0 %v117
  %v120 = vpop.xlane.xlu0 %119
  %121 = vadd.xlane.f32.xlu0 %v118
  %v122 = vpop.xlane.xlu0 %121
  %v123 = vmul.f32 %v120, 0.03125
  %v124 = vmul.f32 %v122, 0.03125
  %v125 = vmul.f32 %v117, %v117
  %v126 = vmul.f32 %v118, %v118
  %127 = vadd.xlane.f32.xlu0 %v125
  %v128 = vpop.xlane.xlu0 %127
  %129 = vadd.xlane.f32.xlu0 %v126
  %v130 = vpop.xlane.xlu0 %129
  %v131 = vmul.f32 %v128, 0.03125
  %v132 = vmul.f32 %v130, 0.03125
  %v133 = vmul.f32 %v123, %v123
  %v134 = vmul.f32 %v124, %v124
  %v135 = vsub.f32 %v131, %v133
  %v136 = vsub.f32 %v132, %v134
  %v137 = vsub.f32 %v117, %v123
  %v138 = vsub.f32 %v118, %v124
  %v139 = vadd.f32 %v135, 1e-12
  %v140 = vadd.f32 %v136, 1e-12
  %v141 = vrsqrt.pop %v139
  %v142 = vrsqrt.pop %v140
  %v143 = vmul.f32 %v137, %v141
  %v144 = vmul.f32 %v138, %v142
  %v145 = vlaneseq
  %v146 = vshrl.u32 %v145, 7
  %v147 = vsub.s32 1, %v146
  %v148 = vrot.slane %v17, %v147
  %v149 = vmul.f32 %v143, %v148
  %v150 = vmul.f32 %v144, %v148
  %v151 = vlaneseq
  %v152 = vshrl.u32 %v151, 7
  %v153 = vsub.s32 2, %v152
  %v154 = vrot.slane %v17, %v153
  %v155 = vadd.f32 %v149, %v154
  %v156 = vadd.f32 %v150, %v154
  %157 = vst [vmem:[%s4] sm:$0xff] %v155
  %158 = vst [vmem:[%s4 + $0x8] sm:$0xff] %v156
  // Predicated region
  $region18: #{bert_self_output_pallas.1} parent=0 // pred_check
    _
  $region19: #{bert_self_output_pallas.1} parent=0 // pred_check_branch
    %160 = sbr.rel (0) target = $region21
  $region20: #{bert_self_output_pallas.1} parent=0 // pred_region
    _
  $region21: #{bert_self_output_pallas.1} parent=0 // pred_fallthru
    _
  // Predicated region
  $region22: #{bert_self_output_pallas.1} parent=0 // pred_check
    _
  $region23: #{bert_self_output_pallas.1} parent=0 // pred_check_branch
    %162 = sbr.rel (0) target = $region25
  $region24: #{bert_self_output_pallas.1} parent=0 // pred_region
    _
  $region25: #{bert_self_output_pallas.1} parent=0 // pred_fallthru
    _

</llo_original>
